<compile_context>
chip_gen: v7x
topology: tpu7x:2x2x1
jax: 0.10.0
libtpu: 0.0.40
codegen_flags: <defaults>
</compile_context>

<pallas_src>
import jax
import jax.numpy as jnp
import numpy as np
from jax.experimental import pallas as pl
from jax.experimental.pallas import tpu as pltpu


def _spectral_mix_kernel(x_ref, w_ref, o_ref):
    """One grid step = one block of Fourier modes (lane axis = modes).

    Block shapes:
      x_ref : (2, B,   Cin,  MK)   [0]=Re(x_ft), [1]=Im(x_ft)
      w_ref : (2, Cin, Cout, MK)   [0]=Re(W),    [1]=Im(W)
      o_ref : (2, B,   Cout, MK)   [0]=Re(out),  [1]=Im(out)

    Computes, per mode k (a lane):  out[b,o,k] = sum_i x[b,i,k] * w[i,o,k]
    with complex arithmetic done as 4 real multiply-accumulates on the VPU.
    """
    cin = x_ref.shape[2]
    out_shape = o_ref.shape[1:]          # (B, Cout, MK)

    xr = x_ref[0]                        # (B, Cin, MK)
    xi = x_ref[1]
    wr = w_ref[0]                        # (Cin, Cout, MK)
    wi = w_ref[1]

    acc_r = jnp.zeros(out_shape, jnp.float32)
    acc_i = jnp.zeros(out_shape, jnp.float32)

    # Static (unrolled) reduction over input channels; all operands stay
    # lane-dense (modes in the lane dimension).
    for i in range(cin):
        xr_i = jnp.broadcast_to(xr[:, i : i + 1, :], out_shape)   # (B, Cout, MK)
        xi_i = jnp.broadcast_to(xi[:, i : i + 1, :], out_shape)
        wr_i = jnp.broadcast_to(wr[i : i + 1], out_shape)
        wi_i = jnp.broadcast_to(wi[i : i + 1], out_shape)
        acc_r = acc_r + xr_i * wr_i - xi_i * wi_i
        acc_i = acc_i + xr_i * wi_i + xi_i * wr_i

    o_ref[0] = acc_r
    o_ref[1] = acc_i


def _choose_mode_block(modes, B, Cin, Cout):
    """Pick a mode-block size that keeps double-buffered blocks well inside
    the 32 MiB scoped VMEM (v7x-safe), preferring a single block."""
    per_lane_bytes = 4 * 2 * (B * Cin + Cin * Cout + B * Cout)   # f32, re+im
    budget = 24 * 1024 * 1024
    max_modes = max(1, budget // (2 * per_lane_bytes))           # 2 = double buffer
    if modes <= max_modes and modes <= 1024:
        return modes, modes                                      # single block
    mk = max(128, (min(max_modes, 1024) // 128) * 128)           # lane-aligned block
    k_pad = ((modes + mk - 1) // mk) * mk
    return mk, k_pad


def spectral_conv1d(x, w_real, w_imag, modes):
    """Forward pass of SpectralConv1d.

    x       : (B, Cin, N) float32  (PyTorch NCW convention)
    w_real  : (Cin, Cout, modes) float32
    w_imag  : (Cin, Cout, modes) float32
    returns : (B, Cout, N) float32
    """
    B, Cin, N = x.shape
    Cout = w_real.shape[1]
    k_full = N // 2 + 1

    # --- glue: real FFT in plain JAX (no Pallas FFT primitive) --------------
    x_ft = jnp.fft.rfft(x.astype(jnp.float32), axis=-1)          # (B, Cin, k_full) c64
    x_low = x_ft[:, :, :modes]

    # Pack real/imag into single arrays; keep modes as the LAST (lane) axis,
    # matching the natural rfft / weight layout (no transposes).
    x_pack = jnp.stack([jnp.real(x_low), jnp.imag(x_low)]).astype(jnp.float32)  # (2,B,Cin,modes)
    w_pack = jnp.stack([w_real, w_imag]).astype(jnp.float32)                    # (2,Cin,Cout,modes)

    mk, k_pad = _choose_mode_block(modes, B, Cin, Cout)
    if k_pad != modes:
        pad = ((0, 0), (0, 0), (0, 0), (0, k_pad - modes))
        x_pack = jnp.pad(x_pack, pad)
        w_pack = jnp.pad(w_pack, pad)
    grid = (k_pad // mk,)

    out_pack = pl.pallas_call(
        _spectral_mix_kernel,
        out_shape=jax.ShapeDtypeStruct((2, B, Cout, k_pad), jnp.float32),
        grid_spec=pltpu.PrefetchScalarGridSpec(
            num_scalar_prefetch=0,
            grid=grid,
            in_specs=[
                pl.BlockSpec((2, B, Cin, mk), lambda m: (0, 0, 0, m)),
                pl.BlockSpec((2, Cin, Cout, mk), lambda m: (0, 0, 0, m)),
            ],
            out_specs=pl.BlockSpec((2, B, Cout, mk), lambda m: (0, 0, 0, m)),
        ),
        compiler_params=pltpu.CompilerParams(
            dimension_semantics=("parallel",),       # mode blocks shard across v7x's 2 TCs
            vmem_limit_bytes=32 * 1024 * 1024,
        ),
    )(x_pack, w_pack)

    # --- glue: pad low modes to the full spectrum, inverse FFT ---------------
    out_ft_low = (out_pack[0, :, :, :modes]
                  + 1j * out_pack[1, :, :, :modes]).astype(jnp.complex64)   # (B, Cout, modes)
    out_ft = jnp.pad(out_ft_low, ((0, 0), (0, 0), (0, k_full - modes)))      # zeros beyond modes
    return jnp.fft.irfft(out_ft, n=N, axis=-1)                               # (B, Cout, N) f32


def _reference(x, w_real, w_imag, modes):
    """Pure-JAX reference mirroring the PyTorch forward."""
    B, Cin, N = x.shape
    Cout = w_real.shape[1]
    x_ft = jnp.fft.rfft(x.astype(jnp.float32), axis=-1)
    w = (w_real + 1j * w_imag).astype(jnp.complex64)
    out_low = jnp.einsum('bix,iox->box', x_ft[:, :, :modes], w)
    out_ft = jnp.zeros((B, Cout, N // 2 + 1), dtype=jnp.complex64)
    out_ft = out_ft.at[:, :, :modes].set(out_low)
    return jnp.fft.irfft(out_ft, n=N, axis=-1)


if __name__ == "__main__":
    # Small shapes consistent with the module.
    B, Cin, Cout, N, modes = 2, 4, 4, 16, 5

    key = jax.random.PRNGKey(0)
    kx, kwr, kwi = jax.random.split(key, 3)

    # Deterministic init mirroring: scale * torch.rand(Cin, Cout, modes, cfloat)
    scale = 1.0 / (Cin * Cout)
    w_real = scale * jax.random.uniform(kwr, (Cin, Cout, modes), dtype=jnp.float32)
    w_imag = scale * jax.random.uniform(kwi, (Cin, Cout, modes), dtype=jnp.float32)

    x = jax.random.normal(kx, (B, Cin, N), dtype=jnp.float32)

    out = spectral_conv1d(x, w_real, w_imag, modes)
    out = jax.block_until_ready(out)

    ref = _reference(x, w_real, w_imag, modes)
    np.testing.assert_allclose(np.asarray(out), np.asarray(ref), rtol=1e-5, atol=1e-5)
    assert out.shape == (B, Cout, N)

    print("KERNEL_OK")
</pallas_src>

<mosaic_0001>
module attributes {stable_mosaic.version = 11 : i64} {
  func.func @_spectral_mix_kernel(%arg0: i32, %arg1: memref<2x2x4x5xf32, #tpu.memory_space<vmem>>, %arg2: memref<2x4x4x5xf32, #tpu.memory_space<vmem>>, %arg3: memref<2x2x4x5xf32, #tpu.memory_space<vmem>>) attributes {dimension_semantics = [#tpu.dimension_semantics<parallel>], iteration_bounds = array<i64: 1>, scalar_prefetch = 0 : i64, scratch_operands = 0 : i64, tpu.core_type = #tpu.core_type<tc>, window_params = [{transform_indices = @transform_0, window_bounds = array<i64: 2, 2, 4, 5>}, {transform_indices = @transform_1, window_bounds = array<i64: 2, 4, 4, 5>}, {transform_indices = @transform_2, window_bounds = array<i64: 2, 2, 4, 5>}]} {
    %c0 = arith.constant 0 : index
    %c0_0 = arith.constant 0 : index
    %c0_1 = arith.constant 0 : index
    %c0_2 = arith.constant 0 : index
    %0 = vector.load %arg1[%c0, %c0_0, %c0_1, %c0_2] : memref<2x2x4x5xf32, #tpu.memory_space<vmem>>, vector<1x2x4x5xf32>
    %1 = vector.shape_cast %0 : vector<1x2x4x5xf32> to vector<2x4x5xf32>
    %c1 = arith.constant 1 : index
    %c0_3 = arith.constant 0 : index
    %c0_4 = arith.constant 0 : index
    %c0_5 = arith.constant 0 : index
    %2 = vector.load %arg1[%c1, %c0_3, %c0_4, %c0_5] : memref<2x2x4x5xf32, #tpu.memory_space<vmem>>, vector<1x2x4x5xf32>
    %3 = vector.shape_cast %2 : vector<1x2x4x5xf32> to vector<2x4x5xf32>
    %c0_6 = arith.constant 0 : index
    %c0_7 = arith.constant 0 : index
    %c0_8 = arith.constant 0 : index
    %c0_9 = arith.constant 0 : index
    %4 = vector.load %arg2[%c0_6, %c0_7, %c0_8, %c0_9] : memref<2x4x4x5xf32, #tpu.memory_space<vmem>>, vector<1x4x4x5xf32>
    %5 = vector.shape_cast %4 : vector<1x4x4x5xf32> to vector<4x4x5xf32>
    %c1_10 = arith.constant 1 : index
    %c0_11 = arith.constant 0 : index
    %c0_12 = arith.constant 0 : index
    %c0_13 = arith.constant 0 : index
    %6 = vector.load %arg2[%c1_10, %c0_11, %c0_12, %c0_13] : memref<2x4x4x5xf32, #tpu.memory_space<vmem>>, vector<1x4x4x5xf32>
    %7 = vector.shape_cast %6 : vector<1x4x4x5xf32> to vector<4x4x5xf32>
    %cst = arith.constant 0.000000e+00 : f32
    %8 = vector.broadcast %cst : f32 to vector<2x4x5xf32>
    %cst_14 = arith.constant 0.000000e+00 : f32
    %9 = vector.broadcast %cst_14 : f32 to vector<2x4x5xf32>
    %10 = vector.extract_strided_slice %1 {offsets = [0, 0, 0], sizes = [2, 1, 5], strides = [1, 1, 1]} : vector<2x4x5xf32> to vector<2x1x5xf32>
    %11 = vector.shape_cast %10 : vector<2x1x5xf32> to vector<2x1x5xf32>
    %12 = vector.broadcast %11 : vector<2x1x5xf32> to vector<2x4x5xf32>
    %13 = vector.extract_strided_slice %3 {offsets = [0, 0, 0], sizes = [2, 1, 5], strides = [1, 1, 1]} : vector<2x4x5xf32> to vector<2x1x5xf32>
    %14 = vector.shape_cast %13 : vector<2x1x5xf32> to vector<2x1x5xf32>
    %15 = vector.broadcast %14 : vector<2x1x5xf32> to vector<2x4x5xf32>
    %16 = vector.extract_strided_slice %5 {offsets = [0, 0, 0], sizes = [1, 4, 5], strides = [1, 1, 1]} : vector<4x4x5xf32> to vector<1x4x5xf32>
    %17 = vector.shape_cast %16 : vector<1x4x5xf32> to vector<1x4x5xf32>
    %18 = vector.broadcast %17 : vector<1x4x5xf32> to vector<2x4x5xf32>
    %19 = vector.extract_strided_slice %7 {offsets = [0, 0, 0], sizes = [1, 4, 5], strides = [1, 1, 1]} : vector<4x4x5xf32> to vector<1x4x5xf32>
    %20 = vector.shape_cast %19 : vector<1x4x5xf32> to vector<1x4x5xf32>
    %21 = vector.broadcast %20 : vector<1x4x5xf32> to vector<2x4x5xf32>
    %22 = arith.mulf %12, %18 : vector<2x4x5xf32>
    %23 = arith.addf %8, %22 : vector<2x4x5xf32>
    %24 = arith.mulf %15, %21 : vector<2x4x5xf32>
    %25 = arith.subf %23, %24 : vector<2x4x5xf32>
    %26 = arith.mulf %12, %21 : vector<2x4x5xf32>
    %27 = arith.addf %9, %26 : vector<2x4x5xf32>
    %28 = arith.mulf %15, %18 : vector<2x4x5xf32>
    %29 = arith.addf %27, %28 : vector<2x4x5xf32>
    %30 = vector.extract_strided_slice %1 {offsets = [0, 1, 0], sizes = [2, 1, 5], strides = [1, 1, 1]} : vector<2x4x5xf32> to vector<2x1x5xf32>
    %31 = vector.shape_cast %30 : vector<2x1x5xf32> to vector<2x1x5xf32>
    %32 = vector.broadcast %31 : vector<2x1x5xf32> to vector<2x4x5xf32>
    %33 = vector.extract_strided_slice %3 {offsets = [0, 1, 0], sizes = [2, 1, 5], strides = [1, 1, 1]} : vector<2x4x5xf32> to vector<2x1x5xf32>
    %34 = vector.shape_cast %33 : vector<2x1x5xf32> to vector<2x1x5xf32>
    %35 = vector.broadcast %34 : vector<2x1x5xf32> to vector<2x4x5xf32>
    %36 = vector.extract_strided_slice %5 {offsets = [1, 0, 0], sizes = [1, 4, 5], strides = [1, 1, 1]} : vector<4x4x5xf32> to vector<1x4x5xf32>
    %37 = vector.shape_cast %36 : vector<1x4x5xf32> to vector<1x4x5xf32>
    %38 = vector.broadcast %37 : vector<1x4x5xf32> to vector<2x4x5xf32>
    %39 = vector.extract_strided_slice %7 {offsets = [1, 0, 0], sizes = [1, 4, 5], strides = [1, 1, 1]} : vector<4x4x5xf32> to vector<1x4x5xf32>
    %40 = vector.shape_cast %39 : vector<1x4x5xf32> to vector<1x4x5xf32>
    %41 = vector.broadcast %40 : vector<1x4x5xf32> to vector<2x4x5xf32>
    %42 = arith.mulf %32, %38 : vector<2x4x5xf32>
    %43 = arith.addf %25, %42 : vector<2x4x5xf32>
    %44 = arith.mulf %35, %41 : vector<2x4x5xf32>
    %45 = arith.subf %43, %44 : vector<2x4x5xf32>
    %46 = arith.mulf %32, %41 : vector<2x4x5xf32>
    %47 = arith.addf %29, %46 : vector<2x4x5xf32>
    %48 = arith.mulf %35, %38 : vector<2x4x5xf32>
    %49 = arith.addf %47, %48 : vector<2x4x5xf32>
    %50 = vector.extract_strided_slice %1 {offsets = [0, 2, 0], sizes = [2, 1, 5], strides = [1, 1, 1]} : vector<2x4x5xf32> to vector<2x1x5xf32>
    %51 = vector.shape_cast %50 : vector<2x1x5xf32> to vector<2x1x5xf32>
    %52 = vector.broadcast %51 : vector<2x1x5xf32> to vector<2x4x5xf32>
    %53 = vector.extract_strided_slice %3 {offsets = [0, 2, 0], sizes = [2, 1, 5], strides = [1, 1, 1]} : vector<2x4x5xf32> to vector<2x1x5xf32>
    %54 = vector.shape_cast %53 : vector<2x1x5xf32> to vector<2x1x5xf32>
    %55 = vector.broadcast %54 : vector<2x1x5xf32> to vector<2x4x5xf32>
    %56 = vector.extract_strided_slice %5 {offsets = [2, 0, 0], sizes = [1, 4, 5], strides = [1, 1, 1]} : vector<4x4x5xf32> to vector<1x4x5xf32>
    %57 = vector.shape_cast %56 : vector<1x4x5xf32> to vector<1x4x5xf32>
    %58 = vector.broadcast %57 : vector<1x4x5xf32> to vector<2x4x5xf32>
    %59 = vector.extract_strided_slice %7 {offsets = [2, 0, 0], sizes = [1, 4, 5], strides = [1, 1, 1]} : vector<4x4x5xf32> to vector<1x4x5xf32>
    %60 = vector.shape_cast %59 : vector<1x4x5xf32> to vector<1x4x5xf32>
    %61 = vector.broadcast %60 : vector<1x4x5xf32> to vector<2x4x5xf32>
    %62 = arith.mulf %52, %58 : vector<2x4x5xf32>
    %63 = arith.addf %45, %62 : vector<2x4x5xf32>
    %64 = arith.mulf %55, %61 : vector<2x4x5xf32>
    %65 = arith.subf %63, %64 : vector<2x4x5xf32>
    %66 = arith.mulf %52, %61 : vector<2x4x5xf32>
    %67 = arith.addf %49, %66 : vector<2x4x5xf32>
    %68 = arith.mulf %55, %58 : vector<2x4x5xf32>
    %69 = arith.addf %67, %68 : vector<2x4x5xf32>
    %70 = vector.extract_strided_slice %1 {offsets = [0, 3, 0], sizes = [2, 1, 5], strides = [1, 1, 1]} : vector<2x4x5xf32> to vector<2x1x5xf32>
    %71 = vector.shape_cast %70 : vector<2x1x5xf32> to vector<2x1x5xf32>
    %72 = vector.broadcast %71 : vector<2x1x5xf32> to vector<2x4x5xf32>
    %73 = vector.extract_strided_slice %3 {offsets = [0, 3, 0], sizes = [2, 1, 5], strides = [1, 1, 1]} : vector<2x4x5xf32> to vector<2x1x5xf32>
    %74 = vector.shape_cast %73 : vector<2x1x5xf32> to vector<2x1x5xf32>
    %75 = vector.broadcast %74 : vector<2x1x5xf32> to vector<2x4x5xf32>
    %76 = vector.extract_strided_slice %5 {offsets = [3, 0, 0], sizes = [1, 4, 5], strides = [1, 1, 1]} : vector<4x4x5xf32> to vector<1x4x5xf32>
    %77 = vector.shape_cast %76 : vector<1x4x5xf32> to vector<1x4x5xf32>
    %78 = vector.broadcast %77 : vector<1x4x5xf32> to vector<2x4x5xf32>
    %79 = vector.extract_strided_slice %7 {offsets = [3, 0, 0], sizes = [1, 4, 5], strides = [1, 1, 1]} : vector<4x4x5xf32> to vector<1x4x5xf32>
    %80 = vector.shape_cast %79 : vector<1x4x5xf32> to vector<1x4x5xf32>
    %81 = vector.broadcast %80 : vector<1x4x5xf32> to vector<2x4x5xf32>
    %82 = arith.mulf %72, %78 : vector<2x4x5xf32>
    %83 = arith.addf %65, %82 : vector<2x4x5xf32>
    %84 = arith.mulf %75, %81 : vector<2x4x5xf32>
    %85 = arith.subf %83, %84 : vector<2x4x5xf32>
    %86 = arith.mulf %72, %81 : vector<2x4x5xf32>
    %87 = arith.addf %69, %86 : vector<2x4x5xf32>
    %88 = arith.mulf %75, %78 : vector<2x4x5xf32>
    %89 = arith.addf %87, %88 : vector<2x4x5xf32>
    %c0_15 = arith.constant 0 : index
    %c0_16 = arith.constant 0 : index
    %c0_17 = arith.constant 0 : index
    %c0_18 = arith.constant 0 : index
    %90 = vector.load %arg3[%c0_15, %c0_16, %c0_17, %c0_18] : memref<2x2x4x5xf32, #tpu.memory_space<vmem>>, vector<1x2x4x5xf32>
    %91 = vector.shape_cast %90 : vector<1x2x4x5xf32> to vector<2x4x5xf32>
    %92 = vector.shape_cast %85 : vector<2x4x5xf32> to vector<1x2x4x5xf32>
    tpu.vector_store %arg3[%c0_15, %c0_16, %c0_17, %c0_18], %92 {strides = array<i32>} : memref<2x2x4x5xf32, #tpu.memory_space<vmem>>, vector<1x2x4x5xf32>,
    %c1_19 = arith.constant 1 : index
    %c0_20 = arith.constant 0 : index
    %c0_21 = arith.constant 0 : index
    %c0_22 = arith.constant 0 : index
    %93 = vector.load %arg3[%c1_19, %c0_20, %c0_21, %c0_22] : memref<2x2x4x5xf32, #tpu.memory_space<vmem>>, vector<1x2x4x5xf32>
    %94 = vector.shape_cast %93 : vector<1x2x4x5xf32> to vector<2x4x5xf32>
    %95 = vector.shape_cast %89 : vector<2x4x5xf32> to vector<1x2x4x5xf32>
    tpu.vector_store %arg3[%c1_19, %c0_20, %c0_21, %c0_22], %95 {strides = array<i32>} : memref<2x2x4x5xf32, #tpu.memory_space<vmem>>, vector<1x2x4x5xf32>,
    return
  }
  func.func @transform_0(%arg0: i32) -> (i32, i32, i32, i32) {
    %c0_i32 = arith.constant 0 : i32
    %c0_i32_0 = arith.constant 0 : i32
    %c0_i32_1 = arith.constant 0 : i32
    %c0_i32_2 = arith.constant 0 : i32
    return %c0_i32, %c0_i32_0, %c0_i32_1, %arg0 : i32, i32, i32, i32
  }
  func.func @transform_1(%arg0: i32) -> (i32, i32, i32, i32) {
    %c0_i32 = arith.constant 0 : i32
    %c0_i32_0 = arith.constant 0 : i32
    %c0_i32_1 = arith.constant 0 : i32
    %c0_i32_2 = arith.constant 0 : i32
    return %c0_i32, %c0_i32_0, %c0_i32_1, %arg0 : i32, i32, i32, i32
  }
  func.func @transform_2(%arg0: i32) -> (i32, i32, i32, i32) {
    %c0_i32 = arith.constant 0 : i32
    %c0_i32_0 = arith.constant 0 : i32
    %c0_i32_1 = arith.constant 0 : i32
    %c0_i32_2 = arith.constant 0 : i32
    return %c0_i32, %c0_i32_0, %c0_i32_1, %arg0 : i32, i32, i32, i32
  }
}

</mosaic_0001>

<llo_original>
// kernel: tpu_custom_call.1
$region0: #{tpu_custom_call.1}
  #allocation0 [shape = 'u32[]', space=smem, size = 0x4, offset = 0x4, fixed_abs, tag = 'smem constant byte address 0x4 - core index']
  #allocation1 [shape = 'u32[144,128]{1,0:T(1,128)}', space=vmem, size = 0x12000, scoped, tag = 'internal scratch']
  %s0 = inlined_call_operand.hbm [shape: f32[2,2,4,5], index: 0, kind: input, shape index: {}]
  %s1 = inlined_call_operand.hbm [shape: f32[2,4,4,5], index: 1, kind: input, shape index: {}]
  %s2 = inlined_call_operand.hbm [shape: f32[2,2,4,5], index: 2, kind: output, shape index: {}]
  %s3 = sld [smem:[#allocation0]]
  $region26: #{tpu_custom_call.1} parent=0
    _
  %s5 = ssub.s32 1, %s3
  %s6 = scalar_select 0, %s5, %s3
  $region1: #{tpu_custom_call.1} parent=0
    #allocation2 [shape = 'u8[8192]{0}', space=vmem, size = 0x2000, scoped, tag = 'input window, operand 0, single buffered']
    #allocation3 [shape = 's32[1]{0}', space=sflag, size = 0x4, scoped, tag = 'scoped memory for tpu_custom_call.1']
    #allocation4 [shape = 's32[1]{0}', space=sflag, size = 0x4, scoped, tag = 'scoped memory for tpu_custom_call.1']
    #allocation5 [shape = 'u8[16384]{0}', space=vmem, size = 0x4000, scoped, tag = 'input window, operand 1, single buffered']
    #allocation6 [shape = 's32[1]{0}', space=sflag, size = 0x4, scoped, tag = 'scoped memory for tpu_custom_call.1']
    #allocation7 [shape = 'u8[8192]{0}', space=vmem, size = 0x2000, scoped, tag = 'output window, operand 0, single buffered']
    %7 = vsyncpa [#allocation3], 0
    %8 = vsyncpa [#allocation6], 0
    %9 = vsyncpa [#allocation4], 0
    // Predicated region
    $region2: #{tpu_custom_call.1} parent=1 // pred_check
      _
    $region3: #{tpu_custom_call.1} parent=1 // pred_check_branch
      %11 = sbr.rel (0) target = $region5
    $region4: #{tpu_custom_call.1} parent=1 // pred_region
      %s13 = ssub.s32 256, 256
      %14 = vsyncadd [#allocation3], %s13
      %s15 = sshll.u32 [#allocation2], 4
      %s16 = int_to_ptr.vmem [resolvable:$true] %s15
      %21 = dma.hbm_to_vmem [thread:$0]  %s0, 256, %s16, [#allocation3], 64, 64, 4
    $region5: #{tpu_custom_call.1} parent=1 // pred_fallthru
      _
    // Predicated region
    $region6: #{tpu_custom_call.1} parent=1 // pred_check
      _
    $region7: #{tpu_custom_call.1} parent=1 // pred_check_branch
      %23 = sbr.rel (0) target = $region9
    $region8: #{tpu_custom_call.1} parent=1 // pred_region
      %s25 = ssub.s32 512, 512
      %26 = vsyncadd [#allocation6], %s25
      %s27 = sshll.u32 [#allocation5], 4
      %s28 = int_to_ptr.vmem [resolvable:$true] %s27
      %33 = dma.hbm_to_vmem [thread:$0]  %s1, 512, %s28, [#allocation6], 64, 64, 4
    $region9: #{tpu_custom_call.1} parent=1 // pred_fallthru
      _
    // Predicated region
    $region10: #{tpu_custom_call.1} parent=1 // pred_check
      _
    $region11: #{tpu_custom_call.1} parent=1 // pred_check_branch
      %35 = sbr.rel (0) target = $region13
    $region12: #{tpu_custom_call.1} parent=1 // pred_region
      %36 = dma.done [#allocation3], 256
    $region13: #{tpu_custom_call.1} parent=1 // pred_fallthru
      _
    // Predicated region
    $region14: #{tpu_custom_call.1} parent=1 // pred_check
      _
    $region15: #{tpu_custom_call.1} parent=1 // pred_check_branch
      %38 = sbr.rel (0) target = $region17
    $region16: #{tpu_custom_call.1} parent=1 // pred_region
      %39 = dma.done [#allocation6], 512
    $region17: #{tpu_custom_call.1} parent=1 // pred_fallthru
      _
    %v40 = vld [vmem:[#allocation2] sm:$0xf]
    %v41 = vld [vmem:[#allocation2 + $0x4] sm:$0xf]
    %s42 = scalar_lea.vmem [#allocation2], 8
    %v43 = vld [vmem:[%s42] sm:$0xf]
    %v44 = vld [vmem:[%s42 + $0x4] sm:$0xf]
    %v45 = vld [vmem:[#allocation5] sm:$0xf]
    %v46 = vld [vmem:[#allocation5 + $0x4] sm:$0xf]
    %v47 = vld [vmem:[#allocation5 + $0x8] sm:$0xf]
    %v48 = vld [vmem:[#allocation5 + $0xc] sm:$0xf]
    %s49 = scalar_lea.vmem [#allocation5], 16
    %v50 = vld [vmem:[%s49] sm:$0xf]
    %v51 = vld [vmem:[%s49 + $0x4] sm:$0xf]
    %v52 = vld [vmem:[%s49 + $0x8] sm:$0xf]
    %v53 = vld [vmem:[%s49 + $0xc] sm:$0xf]
    %v54 = vlaneseq
    %v55 = vshrl.u32 %v54, 7
    %v56 = vsub.s32 0, %v55
    %v57 = vrot.slane %v40, %v56
    %v58 = vlaneseq
    %v59 = vshrl.u32 %v58, 7
    %v60 = vsub.s32 0, %v59
    %v61 = vrot.slane %v41, %v60
    %v62 = vlaneseq
    %v63 = vshrl.u32 %v62, 7
    %v64 = vsub.s32 0, %v63
    %v65 = vrot.slane %v43, %v64
    %v66 = vlaneseq
    %v67 = vshrl.u32 %v66, 7
    %v68 = vsub.s32 0, %v67
    %v69 = vrot.slane %v44, %v68
    %v70 = vmul.f32 %v57, %v45
    %v71 = vmul.f32 %v61, %v45
    %v72 = vadd.f32 %v70, 0.0
    %v73 = vadd.f32 %v71, 0.0
    %v74 = vmul.f32 %v65, %v50
    %v75 = vmul.f32 %v69, %v50
    %v76 = vsub.f32 %v72, %v74
    %v77 = vsub.f32 %v73, %v75
    %v78 = vmul.f32 %v57, %v50
    %v79 = vmul.f32 %v61, %v50
    %v80 = vadd.f32 %v78, 0.0
    %v81 = vadd.f32 %v79, 0.0
    %v82 = vmul.f32 %v65, %v45
    %v83 = vmul.f32 %v69, %v45
    %v84 = vadd.f32 %v80, %v82
    %v85 = vadd.f32 %v81, %v83
    %v86 = vlaneseq
    %v87 = vshrl.u32 %v86, 7
    %v88 = vsub.s32 1, %v87
    %v89 = vrot.slane %v40, %v88
    %v90 = vlaneseq
    %v91 = vshrl.u32 %v90, 7
    %v92 = vsub.s32 1, %v91
    %v93 = vrot.slane %v41, %v92
    %v94 = vlaneseq
    %v95 = vshrl.u32 %v94, 7
    %v96 = vsub.s32 1, %v95
    %v97 = vrot.slane %v43, %v96
    %v98 = vlaneseq
    %v99 = vshrl.u32 %v98, 7
    %v100 = vsub.s32 1, %v99
    %v101 = vrot.slane %v44, %v100
    %v102 = vmul.f32 %v89, %v46
    %v103 = vmul.f32 %v93, %v46
    %v104 = vadd.f32 %v76, %v102
    %v105 = vadd.f32 %v77, %v103
    %v106 = vmul.f32 %v97, %v51
    %v107 = vmul.f32 %v101, %v51
    %v108 = vsub.f32 %v104, %v106
    %v109 = vsub.f32 %v105, %v107
    %v110 = vmul.f32 %v89, %v51
    %v111 = vmul.f32 %v93, %v51
    %v112 = vadd.f32 %v84, %v110
    %v113 = vadd.f32 %v85, %v111
    %v114 = vmul.f32 %v97, %v46
    %v115 = vmul.f32 %v101, %v46
    %v116 = vadd.f32 %v112, %v114
    %v117 = vadd.f32 %v113, %v115
    %v118 = vlaneseq
    %v119 = vshrl.u32 %v118, 7
    %v120 = vsub.s32 2, %v119
    %v121 = vrot.slane %v40, %v120
    %v122 = vlaneseq
    %v123 = vshrl.u32 %v122, 7
    %v124 = vsub.s32 2, %v123
    %v125 = vrot.slane %v41, %v124
    %v126 = vlaneseq
    %v127 = vshrl.u32 %v126, 7
    %v128 = vsub.s32 2, %v127
    %v129 = vrot.slane %v43, %v128
    %v130 = vlaneseq
    %v131 = vshrl.u32 %v130, 7
    %v132 = vsub.s32 2, %v131
    %v133 = vrot.slane %v44, %v132
    %v134 = vmul.f32 %v121, %v47
    %v135 = vmul.f32 %v125, %v47
    %v136 = vadd.f32 %v108, %v134
    %v137 = vadd.f32 %v109, %v135
    %v138 = vmul.f32 %v129, %v52
    %v139 = vmul.f32 %v133, %v52
    %v140 = vsub.f32 %v136, %v138
    %v141 = vsub.f32 %v137, %v139
    %v142 = vmul.f32 %v121, %v52
    %v143 = vmul.f32 %v125, %v52
    %v144 = vadd.f32 %v116, %v142
    %v145 = vadd.f32 %v117, %v143
    %v146 = vmul.f32 %v129, %v47
    %v147 = vmul.f32 %v133, %v47
    %v148 = vadd.f32 %v144, %v146
    %v149 = vadd.f32 %v145, %v147
    %v150 = vlaneseq
    %v151 = vshrl.u32 %v150, 7
    %v152 = vsub.s32 3, %v151
    %v153 = vrot.slane %v40, %v152
    %v154 = vlaneseq
    %v155 = vshrl.u32 %v154, 7
    %v156 = vsub.s32 3, %v155
    %v157 = vrot.slane %v41, %v156
    %v158 = vlaneseq
    %v159 = vshrl.u32 %v158, 7
    %v160 = vsub.s32 3, %v159
    %v161 = vrot.slane %v43, %v160
    %v162 = vlaneseq
    %v163 = vshrl.u32 %v162, 7
    %v164 = vsub.s32 3, %v163
    %v165 = vrot.slane %v44, %v164
    %v166 = vmul.f32 %v153, %v48
    %v167 = vmul.f32 %v157, %v48
    %v168 = vadd.f32 %v140, %v166
    %v169 = vadd.f32 %v141, %v167
    %v170 = vmul.f32 %v161, %v53
    %v171 = vmul.f32 %v165, %v53
    %v172 = vsub.f32 %v168, %v170
    %v173 = vsub.f32 %v169, %v171
    %v174 = vmul.f32 %v153, %v53
    %v175 = vmul.f32 %v157, %v53
    %v176 = vadd.f32 %v148, %v174
    %v177 = vadd.f32 %v149, %v175
    %v178 = vmul.f32 %v161, %v48
    %v179 = vmul.f32 %v165, %v48
    %v180 = vadd.f32 %v176, %v178
    %v181 = vadd.f32 %v177, %v179
    %vm182 = vcmask 35840
    %183 = vst.msk [vmem:[#allocation7] sm:$0xf] %vm182, %v172
    %184 = vst.msk [vmem:[#allocation7 + $0x4] sm:$0xf] %vm182, %v173
    %s185 = scalar_lea.vmem [#allocation7], 8
    %186 = vst.msk [vmem:[%s185] sm:$0xf] %vm182, %v180
    %187 = vst.msk [vmem:[%s185 + $0x4] sm:$0xf] %vm182, %v181
    // Predicated region
    $region18: #{tpu_custom_call.1} parent=1 // pred_check
      _
    $region19: #{tpu_custom_call.1} parent=1 // pred_check_branch
      %189 = sbr.rel (0) target = $region21
    $region20: #{tpu_custom_call.1} parent=1 // pred_region
      %s191 = ssub.s32 256, 256
      %192 = vsyncadd [#allocation4], %s191
      %s193 = sshll.u32 [#allocation7], 4
      %s194 = int_to_ptr.vmem [resolvable:$true] %s193
      %199 = dma.vmem_to_hbm [thread:$0]  %s194, 256, %s2, [#allocation4], 64, 64, 4
    $region21: #{tpu_custom_call.1} parent=1 // pred_fallthru
      _
    // Predicated region
    $region22: #{tpu_custom_call.1} parent=1 // pred_check
      _
    $region23: #{tpu_custom_call.1} parent=1 // pred_check_branch
      %201 = sbr.rel (0) target = $region25
    $region24: #{tpu_custom_call.1} parent=1 // pred_region
      %202 = dma.done [#allocation4], 256
    $region25: #{tpu_custom_call.1} parent=1 // pred_fallthru
      _
    %203 = vsyncpa [#allocation3], 1
    %204 = vsyncpa [#allocation6], 1
    %205 = vsyncpa [#allocation4], 1

</llo_original>
